<compile_context>
chip_gen: v7x
topology: tpu7x:2x2x1
jax: 0.10.0
libtpu: 0.0.40
codegen_flags: <defaults>
</compile_context>

<pallas_src>
import functools

import jax
import jax.numpy as jnp
from jax.experimental import pallas as pl
from jax.experimental.pallas import tpu as pltpu


def dyrelu_kernel(x_ref, w1t_ref, b1_ref, w2_ref, b2_ref, out_ref, *, inv_p):
    # x_ref:   (1, C, P)   one batch sample, spatial flattened onto lanes
    # w1t_ref: (C, Cr)     conv1 weight, transposed (in-channel on sublanes)
    # b1_ref:  (1, Cr)
    # w2_ref:  (4, C, Cr)  conv2 weight regrouped as (coeff-kind, channel, Cr)
    # b2_ref:  (4, C, 1)
    # out_ref: (1, C, P)
    x = x_ref[0]                                              # (C, P)

    # Global average pool: per-channel mean over the lane (spatial) axis.
    pooled = jnp.sum(x, axis=1, keepdims=True) * inv_p        # (C, 1)

    # conv1 (1x1) + ReLU.  Tiny contraction (C -> C//ratio): broadcast-mul on
    # the VPU + sublane reduction; the MXU would be <1% utilized here.
    h = jnp.sum(w1t_ref[...] * pooled, axis=0, keepdims=True) + b1_ref[...]   # (1, Cr)
    h = jnp.maximum(h, 0.0)

    # conv2 (1x1) -> Hsigmoid(h_max=1) - 0.5, giving the 4 coefficient sets.
    co = jnp.sum(w2_ref[...] * h[None, :, :], axis=2, keepdims=True)          # (4, C, 1)
    co = co + b2_ref[...]
    co = jnp.clip(co + 3.0, 0.0, 6.0) * (1.0 / 6.0) - 0.5

    a1 = co[0] * 2.0 + 1.0                                    # (C, 1)
    b1c = co[1]
    a2 = co[2] * 2.0
    b2c = co[3]

    # Dynamic ReLU: lane-broadcast per-channel coefficients over P and write
    # the whole (C, P) slab in one full-width lane-dense store.
    out_ref[0] = jnp.maximum(x * a1 + b1c, x * a2 + b2c)


def dyrelu_forward(x, w1, b1, w2, b2, *, ratio=4):
    """x: (N, C, H, W); w1: (C//ratio, C, 1, 1); b1: (C//ratio,);
    w2: (4*C, C//ratio, 1, 1); b2: (4*C,).  Returns (N, C, H, W)."""
    N, C, H, W = x.shape
    P = H * W
    Cr = w1.shape[0]
    assert Cr == C // ratio
    assert w2.shape[0] == 4 * C

    x3 = x.reshape(N, C, P)
    w1t = jnp.transpose(w1.reshape(Cr, C), (1, 0)).astype(x.dtype)   # (C, Cr)
    b1_l = b1.reshape(1, Cr).astype(x.dtype)
    w2g = w2.reshape(4, C, Cr).astype(x.dtype)                       # coeff-kind major
    b2g = b2.reshape(4, C, 1).astype(x.dtype)

    kern = functools.partial(dyrelu_kernel, inv_p=1.0 / P)

    itemsize = jnp.dtype(x.dtype).itemsize
    flops = 6 * N * C * P  # pool sum + 2 FMAs + max per element (coeff MLP negligible)
    bytes_accessed = (2 * N * C * P + C * Cr + Cr + 4 * C * Cr + 4 * C) * itemsize

    out = pl.pallas_call(
        kern,
        out_shape=jax.ShapeDtypeStruct((N, C, P), x.dtype),
        grid=(N,),
        in_specs=[
            pl.BlockSpec((1, C, P), lambda n: (n, 0, 0)),
            pl.BlockSpec((C, Cr), lambda n: (0, 0)),
            pl.BlockSpec((1, Cr), lambda n: (0, 0)),
            pl.BlockSpec((4, C, Cr), lambda n: (0, 0, 0)),
            pl.BlockSpec((4, C, 1), lambda n: (0, 0, 0)),
        ],
        out_specs=pl.BlockSpec((1, C, P), lambda n: (n, 0, 0)),
        # Batch samples are fully independent -> parallel grid axis
        # (megacore sharding on v7x; neutral on v5e/v6e).
        compiler_params=pltpu.CompilerParams(dimension_semantics=("parallel",)),
        cost_estimate=pl.CostEstimate(
            flops=flops, transcendentals=0, bytes_accessed=bytes_accessed),
    )(x3, w1t, b1_l, w2g, b2g)

    return out.reshape(N, C, H, W)


# ----------------------------- pure-JAX reference (sanity check) -----------------------------
def dyrelu_reference(x, w1, b1, w2, b2):
    N, C, H, W = x.shape
    Cr = w1.shape[0]
    pooled = jnp.mean(x, axis=(2, 3))                          # (N, C)
    h = jnp.maximum(pooled @ w1.reshape(Cr, C).T + b1[None, :], 0.0)       # (N, Cr)
    co = h @ w2.reshape(4 * C, Cr).T + b2[None, :]                          # (N, 4C)
    co = jnp.clip(co + 3.0, 0.0, 6.0) / 6.0 - 0.5
    a1 = (co[:, 0:C] * 2.0 + 1.0)[:, :, None, None]
    b1c = co[:, C:2 * C][:, :, None, None]
    a2 = (co[:, 2 * C:3 * C] * 2.0)[:, :, None, None]
    b2c = co[:, 3 * C:4 * C][:, :, None, None]
    return jnp.maximum(x * a1 + b1c, x * a2 + b2c)


if __name__ == "__main__":
    # Small shapes: batch=2, channels=4 (cardinality), spatial 16x16, ratio=4.
    N, C, H, W = 2, 4, 16, 16
    ratio = 4
    Cr = C // ratio        # conv1 out channels
    Ce = 4 * C             # conv2 out channels (expansion = 4)

    key = jax.random.PRNGKey(0)
    kx, kw1, kb1, kw2, kb2 = jax.random.split(key, 5)

    x = jax.random.normal(kx, (N, C, H, W), dtype=jnp.float32)
    w1 = 0.5 * jax.random.normal(kw1, (Cr, C, 1, 1), dtype=jnp.float32)
    b1 = 0.1 * jax.random.normal(kb1, (Cr,), dtype=jnp.float32)
    w2 = 0.5 * jax.random.normal(kw2, (Ce, Cr, 1, 1), dtype=jnp.float32)
    b2 = 0.1 * jax.random.normal(kb2, (Ce,), dtype=jnp.float32)

    out = dyrelu_forward(x, w1, b1, w2, b2, ratio=ratio)
    out = jax.block_until_ready(out)

    ref = dyrelu_reference(x, w1, b1, w2, b2)
    assert out.shape == (N, C, H, W)
    assert jnp.allclose(out, ref, atol=1e-4, rtol=1e-4), "mismatch vs reference"

    print("KERNEL_OK")
</pallas_src>

<mosaic_0001>
module attributes {stable_mosaic.version = 11 : i64} {
  func.func @dyrelu_kernel(%arg0: i32, %arg1: memref<1x4x256xf32, #tpu.memory_space<vmem>>, %arg2: memref<4x1xf32, #tpu.memory_space<vmem>>, %arg3: memref<1x1xf32, #tpu.memory_space<vmem>>, %arg4: memref<4x4x1xf32, #tpu.memory_space<vmem>>, %arg5: memref<4x4x1xf32, #tpu.memory_space<vmem>>, %arg6: memref<1x4x256xf32, #tpu.memory_space<vmem>>) attributes {dimension_semantics = [#tpu.dimension_semantics<parallel>], iteration_bounds = array<i64: 2>, scalar_prefetch = 0 : i64, scratch_operands = 0 : i64, tpu.core_type = #tpu.core_type<tc>, window_params = [{transform_indices = @transform_0, window_bounds = array<i64: 1, 4, 256>}, {pipeline_mode = #tpu.pipeline_mode<synchronous>, transform_indices = @transform_1, window_bounds = array<i64: 4, 1>}, {pipeline_mode = #tpu.pipeline_mode<synchronous>, transform_indices = @transform_2, window_bounds = array<i64: 1, 1>}, {pipeline_mode = #tpu.pipeline_mode<synchronous>, transform_indices = @transform_3, window_bounds = array<i64: 4, 4, 1>}, {pipeline_mode = #tpu.pipeline_mode<synchronous>, transform_indices = @transform_4, window_bounds = array<i64: 4, 4, 1>}, {transform_indices = @transform_5, window_bounds = array<i64: 1, 4, 256>}]} {
    %c0 = arith.constant 0 : index
    %c0_0 = arith.constant 0 : index
    %c0_1 = arith.constant 0 : index
    %0 = vector.load %arg1[%c0, %c0_0, %c0_1] : memref<1x4x256xf32, #tpu.memory_space<vmem>>, vector<1x4x256xf32>
    %1 = vector.shape_cast %0 : vector<1x4x256xf32> to vector<4x256xf32>
    %cst = arith.constant dense<0.000000e+00> : vector<4xf32>
    %2 = vector.multi_reduction <add>, %1, %cst [1] : vector<4x256xf32> to vector<4xf32>
    %3 = vector.shape_cast %2 : vector<4xf32> to vector<4x1xf32>
    %cst_2 = arith.constant 3.906250e-03 : f32
    %4 = vector.broadcast %cst_2 : f32 to vector<4x1xf32>
    %5 = arith.mulf %3, %4 : vector<4x1xf32>
    %c0_3 = arith.constant 0 : index
    %c0_4 = arith.constant 0 : index
    %6 = vector.load %arg2[%c0_3, %c0_4] : memref<4x1xf32, #tpu.memory_space<vmem>>, vector<4x1xf32>
    %7 = arith.mulf %6, %5 : vector<4x1xf32>
    %cst_5 = arith.constant dense<0.000000e+00> : vector<1xf32>
    %8 = vector.multi_reduction <add>, %7, %cst_5 [0] : vector<4x1xf32> to vector<1xf32>
    %9 = vector.shape_cast %8 : vector<1xf32> to vector<1x1xf32>
    %c0_6 = arith.constant 0 : index
    %c0_7 = arith.constant 0 : index
    %10 = vector.load %arg3[%c0_6, %c0_7] : memref<1x1xf32, #tpu.memory_space<vmem>>, vector<1x1xf32>
    %11 = arith.addf %9, %10 : vector<1x1xf32>
    %cst_8 = arith.constant 0.000000e+00 : f32
    %12 = vector.broadcast %cst_8 : f32 to vector<1x1xf32>
    %13 = arith.maximumf %11, %12 : vector<1x1xf32>
    %c0_9 = arith.constant 0 : index
    %c0_10 = arith.constant 0 : index
    %c0_11 = arith.constant 0 : index
    %14 = vector.load %arg4[%c0_9, %c0_10, %c0_11] : memref<4x4x1xf32, #tpu.memory_space<vmem>>, vector<4x4x1xf32>
    %15 = vector.shape_cast %13 : vector<1x1xf32> to vector<1x1x1xf32>
    %16 = vector.broadcast %15 : vector<1x1x1xf32> to vector<4x4x1xf32>
    %17 = arith.mulf %14, %16 : vector<4x4x1xf32>
    %cst_12 = arith.constant dense<0.000000e+00> : vector<4x4xf32>
    %18 = vector.multi_reduction <add>, %17, %cst_12 [2] : vector<4x4x1xf32> to vector<4x4xf32>
    %19 = vector.shape_cast %18 : vector<4x4xf32> to vector<4x4x1xf32>
    %c0_13 = arith.constant 0 : index
    %c0_14 = arith.constant 0 : index
    %c0_15 = arith.constant 0 : index
    %20 = vector.load %arg5[%c0_13, %c0_14, %c0_15] : memref<4x4x1xf32, #tpu.memory_space<vmem>>, vector<4x4x1xf32>
    %21 = arith.addf %19, %20 : vector<4x4x1xf32>
    %cst_16 = arith.constant 3.000000e+00 : f32
    %22 = vector.broadcast %cst_16 : f32 to vector<4x4x1xf32>
    %23 = arith.addf %21, %22 : vector<4x4x1xf32>
    %cst_17 = arith.constant 0.000000e+00 : f32
    %cst_18 = arith.constant 6.000000e+00 : f32
    %24 = vector.broadcast %cst_17 : f32 to vector<4x4x1xf32>
    %25 = arith.maximumf %24, %23 : vector<4x4x1xf32>
    %26 = vector.broadcast %cst_18 : f32 to vector<4x4x1xf32>
    %27 = arith.minimumf %26, %25 : vector<4x4x1xf32>
    %cst_19 = arith.constant 0.166666672 : f32
    %28 = vector.broadcast %cst_19 : f32 to vector<4x4x1xf32>
    %29 = arith.mulf %27, %28 : vector<4x4x1xf32>
    %cst_20 = arith.constant 5.000000e-01 : f32
    %30 = vector.broadcast %cst_20 : f32 to vector<4x4x1xf32>
    %31 = arith.subf %29, %30 : vector<4x4x1xf32>
    %32 = vector.extract_strided_slice %31 {offsets = [0, 0, 0], sizes = [1, 4, 1], strides = [1, 1, 1]} : vector<4x4x1xf32> to vector<1x4x1xf32>
    %33 = vector.shape_cast %32 : vector<1x4x1xf32> to vector<4x1xf32>
    %cst_21 = arith.constant 2.000000e+00 : f32
    %34 = vector.broadcast %cst_21 : f32 to vector<4x1xf32>
    %35 = arith.mulf %33, %34 : vector<4x1xf32>
    %cst_22 = arith.constant 1.000000e+00 : f32
    %36 = vector.broadcast %cst_22 : f32 to vector<4x1xf32>
    %37 = arith.addf %35, %36 : vector<4x1xf32>
    %38 = vector.extract_strided_slice %31 {offsets = [1, 0, 0], sizes = [1, 4, 1], strides = [1, 1, 1]} : vector<4x4x1xf32> to vector<1x4x1xf32>
    %39 = vector.shape_cast %38 : vector<1x4x1xf32> to vector<4x1xf32>
    %40 = vector.extract_strided_slice %31 {offsets = [2, 0, 0], sizes = [1, 4, 1], strides = [1, 1, 1]} : vector<4x4x1xf32> to vector<1x4x1xf32>
    %41 = vector.shape_cast %40 : vector<1x4x1xf32> to vector<4x1xf32>
    %cst_23 = arith.constant 2.000000e+00 : f32
    %42 = vector.broadcast %cst_23 : f32 to vector<4x1xf32>
    %43 = arith.mulf %41, %42 : vector<4x1xf32>
    %44 = vector.extract_strided_slice %31 {offsets = [3, 0, 0], sizes = [1, 4, 1], strides = [1, 1, 1]} : vector<4x4x1xf32> to vector<1x4x1xf32>
    %45 = vector.shape_cast %44 : vector<1x4x1xf32> to vector<4x1xf32>
    %46 = vector.broadcast %37 : vector<4x1xf32> to vector<4x256xf32>
    %47 = arith.mulf %1, %46 : vector<4x256xf32>
    %48 = vector.broadcast %39 : vector<4x1xf32> to vector<4x256xf32>
    %49 = arith.addf %47, %48 : vector<4x256xf32>
    %50 = vector.broadcast %43 : vector<4x1xf32> to vector<4x256xf32>
    %51 = arith.mulf %1, %50 : vector<4x256xf32>
    %52 = vector.broadcast %45 : vector<4x1xf32> to vector<4x256xf32>
    %53 = arith.addf %51, %52 : vector<4x256xf32>
    %54 = arith.maximumf %49, %53 : vector<4x256xf32>
    %c0_24 = arith.constant 0 : index
    %c0_25 = arith.constant 0 : index
    %c0_26 = arith.constant 0 : index
    %55 = vector.load %arg6[%c0_24, %c0_25, %c0_26] : memref<1x4x256xf32, #tpu.memory_space<vmem>>, vector<1x4x256xf32>
    %56 = vector.shape_cast %55 : vector<1x4x256xf32> to vector<4x256xf32>
    %57 = vector.shape_cast %54 : vector<4x256xf32> to vector<1x4x256xf32>
    tpu.vector_store %arg6[%c0_24, %c0_25, %c0_26], %57 {strides = array<i32>} : memref<1x4x256xf32, #tpu.memory_space<vmem>>, vector<1x4x256xf32>,
    return
  }
  func.func @transform_0(%arg0: i32) -> (i32, i32, i32) {
    %c0_i32 = arith.constant 0 : i32
    %c0_i32_0 = arith.constant 0 : i32
    %c0_i32_1 = arith.constant 0 : i32
    return %arg0, %c0_i32, %c0_i32_0 : i32, i32, i32
  }
  func.func @transform_1(%arg0: i32) -> (i32, i32) {
    %c0_i32 = arith.constant 0 : i32
    %c0_i32_0 = arith.constant 0 : i32
    %c0_i32_1 = arith.constant 0 : i32
    return %c0_i32, %c0_i32_0 : i32, i32
  }
  func.func @transform_2(%arg0: i32) -> (i32, i32) {
    %c0_i32 = arith.constant 0 : i32
    %c0_i32_0 = arith.constant 0 : i32
    %c0_i32_1 = arith.constant 0 : i32
    return %c0_i32, %c0_i32_0 : i32, i32
  }
  func.func @transform_3(%arg0: i32) -> (i32, i32, i32) {
    %c0_i32 = arith.constant 0 : i32
    %c0_i32_0 = arith.constant 0 : i32
    %c0_i32_1 = arith.constant 0 : i32
    %c0_i32_2 = arith.constant 0 : i32
    return %c0_i32, %c0_i32_0, %c0_i32_1 : i32, i32, i32
  }
  func.func @transform_4(%arg0: i32) -> (i32, i32, i32) {
    %c0_i32 = arith.constant 0 : i32
    %c0_i32_0 = arith.constant 0 : i32
    %c0_i32_1 = arith.constant 0 : i32
    %c0_i32_2 = arith.constant 0 : i32
    return %c0_i32, %c0_i32_0, %c0_i32_1 : i32, i32, i32
  }
  func.func @transform_5(%arg0: i32) -> (i32, i32, i32) {
    %c0_i32 = arith.constant 0 : i32
    %c0_i32_0 = arith.constant 0 : i32
    %c0_i32_1 = arith.constant 0 : i32
    return %arg0, %c0_i32, %c0_i32_0 : i32, i32, i32
  }
}

</mosaic_0001>

<llo_original>
// kernel: tpu_custom_call.1
$region0: #{tpu_custom_call.1}
  #allocation0 [shape = 'u32[]', space=smem, size = 0x4, offset = 0x4, fixed_abs, tag = 'smem constant byte address 0x4 - core index']
  #allocation1 [shape = 'u32[144,128]{1,0:T(1,128)}', space=vmem, size = 0x12000, scoped, tag = 'internal scratch']
  #allocation2 [shape = 'f32[1,1]{1,0:T(1,128)S(1)}', space=vmem, size = 0x200, scoped, tag = 'scoped memory for tpu_custom_call.1']
  %s0 = inlined_call_operand.vmem [shape: f32[2,4,256], index: 0, kind: input, shape index: {}]
  %s1 = inlined_call_operand.vmem [shape: f32[4,1], index: 1, kind: input, shape index: {}]
  %s2 = inlined_call_operand.<no memory space> [shape: f32[1,1], index: 2, kind: input, shape index: {}]
  %s3 = inlined_call_operand.vmem [shape: f32[4,4,1], index: 3, kind: input, shape index: {}]
  %s4 = inlined_call_operand.vmem [shape: f32[4,4,1], index: 4, kind: input, shape index: {}]
  %s5 = inlined_call_operand.hbm [shape: f32[2,4,256], index: 5, kind: output, shape index: {}]
  %s6 = sld [smem:[#allocation0]]
  $region53: #{tpu_custom_call.1} parent=0
    _
  %s8 = ssub.s32 1, %s6
  %s9 = scalar_select 0, %s8, %s6
  %v10 = vstv %s2
  %11 = vst [vmem:[#allocation2] sm:$0x1] %v10
  $region1: #{tpu_custom_call.1} parent=0
    #allocation3 [shape = 'u8[8192]{0}', space=vmem, size = 0x2000, scoped, tag = 'output window, operand 0']
    #allocation4 [shape = 's32[2]{0}', space=sflag, size = 0x8, scoped, tag = 'scoped memory for tpu_custom_call.1']
    %12 = vsyncpa [#allocation4], 0
    %s13 = scalar_lea.sflag [#allocation4], 1
    %14 = vsyncpa %s13, 0
    loop: start=0, step=1, limit=4
    $region2: #{tpu_custom_call.1} parent=1 // loop_pre_header
      _
    $region3: #{tpu_custom_call.1} parent=1 // loop_header
      %s16 = sphi 0, %s20
      %p17 = scmp.ge.s32.totalorder %s16, 4
      %s26 = sphi 0, %s28
      %s29 = sphi 0, %s26
      %s30 = sphi 0, %s29
      %s46 = sphi 0, %s30
      %s50 = sphi 0, %s50
      %s52 = sphi 0, %s50
      %s53 = sphi 0, %s52
      %s67 = sphi 0, %s53
      %s71 = sphi 0, %s71
      %s73 = sphi 0, %s71
      %s74 = sphi 0, %s73
      %s88 = sphi 0, %s74
      %s92 = sphi 0, %s92
      %s94 = sphi 0, %s92
      %s95 = sphi 0, %s94
      %s109 = sphi 0, %s95
      %s113 = sphi 0, %s113
      %s115 = sphi 0, %s113
      %s116 = sphi 0, %s115
      %s130 = sphi 0, %s116
      %s136 = sphi 0, %s138
      %s139 = sphi 0, %s136
      %s140 = sphi 0, %s139
      %s156 = sphi 0, %s140
    $region4: #{tpu_custom_call.1} parent=1 // loop_header_branch
      %19 = sbr.rel (%p17) target = $region8
    $region5: #{tpu_custom_call.1} parent=1 // loop_body
      %s21 = ssub.s32 %s16, 1
      %s22 = ssub.s32 %s16, 2
      %s23 = sadd.s32 %s16, 1
      %s24 = ssub.s32 %s16, %s23
      %p25 = scmp.eq.s32.totalorder %s24, 0
      %s27 = sadd.s32 %s26, 1
      %s28 = scalar_select %p25, %s26, %s27
      %p31 = pneg %p25
      %p32 = scmp.eq.s32.totalorder %s16, 1
      %p33 = por %p31, %p32
      %p34 = scmp.ne.s32.totalorder %s26, %s29
      %p35 = scmp.eq.s32.totalorder %s16, 0
      %p36 = por %p34, %p35
      %p37 = scmp.ne.s32.totalorder %s26, %s29
      %p38 = scmp.eq.s32.totalorder %s21, 1
      %p39 = por %p37, %p38
      %p40 = scmp.ne.s32.totalorder %s29, %s30
      %p41 = scmp.eq.s32.totalorder %s21, 0
      %p42 = por %p40, %p41
      %p43 = scmp.ne.s32.totalorder %s29, %s30
      %p44 = scmp.eq.s32.totalorder %s22, 1
      %p45 = por %p43, %p44
      %p47 = scmp.ne.s32.totalorder %s30, %s46
      %p48 = scmp.eq.s32.totalorder %s22, 0
      %p49 = por %p47, %p48
      %s51 = sadd.s32 %s50, 1
      %p54 = scmp.eq.s32.totalorder %s16, 1
      %p55 = scmp.ne.s32.totalorder %s50, %s52
      %p56 = scmp.eq.s32.totalorder %s16, 0
      %p57 = por %p55, %p56
      %p58 = scmp.ne.s32.totalorder %s50, %s52
      %p59 = scmp.eq.s32.totalorder %s21, 1
      %p60 = por %p58, %p59
      %p61 = scmp.ne.s32.totalorder %s52, %s53
      %p62 = scmp.eq.s32.totalorder %s21, 0
      %p63 = por %p61, %p62
      %p64 = scmp.ne.s32.totalorder %s52, %s53
      %p65 = scmp.eq.s32.totalorder %s22, 1
      %p66 = por %p64, %p65
      %p68 = scmp.ne.s32.totalorder %s53, %s67
      %p69 = scmp.eq.s32.totalorder %s22, 0
      %p70 = por %p68, %p69
      %s72 = sadd.s32 %s71, 1
      %p75 = scmp.eq.s32.totalorder %s16, 1
      %p76 = scmp.ne.s32.totalorder %s71, %s73
      %p77 = scmp.eq.s32.totalorder %s16, 0
      %p78 = por %p76, %p77
      %p79 = scmp.ne.s32.totalorder %s71, %s73
      %p80 = scmp.eq.s32.totalorder %s21, 1
      %p81 = por %p79, %p80
      %p82 = scmp.ne.s32.totalorder %s73, %s74
      %p83 = scmp.eq.s32.totalorder %s21, 0
      %p84 = por %p82, %p83
      %p85 = scmp.ne.s32.totalorder %s73, %s74
      %p86 = scmp.eq.s32.totalorder %s22, 1
      %p87 = por %p85, %p86
      %p89 = scmp.ne.s32.totalorder %s74, %s88
      %p90 = scmp.eq.s32.totalorder %s22, 0
      %p91 = por %p89, %p90
      %s93 = sadd.s32 %s92, 1
      %p96 = scmp.eq.s32.totalorder %s16, 1
      %p97 = scmp.ne.s32.totalorder %s92, %s94
      %p98 = scmp.eq.s32.totalorder %s16, 0
      %p99 = por %p97, %p98
      %p100 = scmp.ne.s32.totalorder %s92, %s94
      %p101 = scmp.eq.s32.totalorder %s21, 1
      %p102 = por %p100, %p101
      %p103 = scmp.ne.s32.totalorder %s94, %s95
      %p104 = scmp.eq.s32.totalorder %s21, 0
      %p105 = por %p103, %p104
      %p106 = scmp.ne.s32.totalorder %s94, %s95
      %p107 = scmp.eq.s32.totalorder %s22, 1
      %p108 = por %p106, %p107
      %p110 = scmp.ne.s32.totalorder %s95, %s109
      %p111 = scmp.eq.s32.totalorder %s22, 0
      %p112 = por %p110, %p111
      %s114 = sadd.s32 %s113, 1
      %p117 = scmp.eq.s32.totalorder %s16, 1
      %p118 = scmp.ne.s32.totalorder %s113, %s115
      %p119 = scmp.eq.s32.totalorder %s16, 0
      %p120 = por %p118, %p119
      %p121 = scmp.ne.s32.totalorder %s113, %s115
      %p122 = scmp.eq.s32.totalorder %s21, 1
      %p123 = por %p121, %p122
      %p124 = scmp.ne.s32.totalorder %s115, %s116
      %p125 = scmp.eq.s32.totalorder %s21, 0
      %p126 = por %p124, %p125
      %p127 = scmp.ne.s32.totalorder %s115, %s116
      %p128 = scmp.eq.s32.totalorder %s22, 1
      %p129 = por %p127, %p128
      %p131 = scmp.ne.s32.totalorder %s116, %s130
      %p132 = scmp.eq.s32.totalorder %s22, 0
      %p133 = por %p131, %p132
      %s134 = ssub.s32 %s16, %s23
      %p135 = scmp.eq.s32.totalorder %s134, 0
      %s137 = sadd.s32 %s136, 1
      %s138 = scalar_select %p135, %s136, %s137
      %p141 = pneg %p135
      %p142 = scmp.eq.s32.totalorder %s16, 1
      %p143 = por %p141, %p142
      %p144 = scmp.ne.s32.totalorder %s136, %s139
      %p145 = scmp.eq.s32.totalorder %s16, 0
      %p146 = por %p144, %p145
      %p147 = scmp.ne.s32.totalorder %s136, %s139
      %p148 = scmp.eq.s32.totalorder %s21, 1
      %p149 = por %p147, %p148
      %p150 = scmp.ne.s32.totalorder %s139, %s140
      %p151 = scmp.eq.s32.totalorder %s21, 0
      %p152 = por %p150, %p151
      %p153 = scmp.ne.s32.totalorder %s139, %s140
      %p154 = scmp.eq.s32.totalorder %s22, 1
      %p155 = por %p153, %p154
      %p157 = scmp.ne.s32.totalorder %s140, %s156
      %p158 = scmp.eq.s32.totalorder %s22, 0
      %p159 = por %p157, %p158
      %p160 = scmp.le.s32.totalorder 1, %s16
      %p161 = scmp.lt.s32.totalorder %s16, 3
      %p162 = pnand %p160, %p161
      %p163 = pneg %p162
      // Predicated region
      $region9: #{tpu_custom_call.1} parent=5 // pred_check
        _
      $region10: #{tpu_custom_call.1} parent=5 // pred_check_branch
        %165 = sbr.rel (%p162) target = $region12
      $region11: #{tpu_custom_call.1} parent=5 // pred_region
        %s166 = ssub.s32 %s16, 1
        // Predicated region
        $region13: #{tpu_custom_call.1} parent=11 // pred_check
          %p167 = pneg %p63
        $region14: #{tpu_custom_call.1} parent=11 // pred_check_branch
          %169 = sbr.rel (%p167) target = $region16
        $region15: #{tpu_custom_call.1} parent=11 // pred_region
          _
        $region16: #{tpu_custom_call.1} parent=11 // pred_fallthru
          _
        // Predicated region
        $region17: #{tpu_custom_call.1} parent=11 // pred_check
          %p170 = pneg %p84
        $region18: #{tpu_custom_call.1} parent=11 // pred_check_branch
          %172 = sbr.rel (%p170) target = $region20
        $region19: #{tpu_custom_call.1} parent=11 // pred_region
          _
        $region20: #{tpu_custom_call.1} parent=11 // pred_fallthru
          _
        // Predicated region
        $region21: #{tpu_custom_call.1} parent=11 // pred_check
          %p173 = pneg %p105
        $region22: #{tpu_custom_call.1} parent=11 // pred_check_branch
          %175 = sbr.rel (%p173) target = $region24
        $region23: #{tpu_custom_call.1} parent=11 // pred_region
          _
        $region24: #{tpu_custom_call.1} parent=11 // pred_fallthru
          _
        // Predicated region
        $region25: #{tpu_custom_call.1} parent=11 // pred_check
          %p176 = pneg %p126
        $region26: #{tpu_custom_call.1} parent=11 // pred_check_branch
          %178 = sbr.rel (%p176) target = $region28
        $region27: #{tpu_custom_call.1} parent=11 // pred_region
          _
        $region28: #{tpu_custom_call.1} parent=11 // pred_fallthru
          _
      $region12: #{tpu_custom_call.1} parent=5 // pred_fallthru
        _
      %p179 = scmp.lt.s32.totalorder %s16, 2
      // Predicated region
      $region29: #{tpu_custom_call.1} parent=5 // pred_check
        %p180 = pneg %p179
      $region30: #{tpu_custom_call.1} parent=5 // pred_check_branch
        %182 = sbr.rel (%p180) target = $region32
      $region31: #{tpu_custom_call.1} parent=5 // pred_region
        // Predicated region
        $region33: #{tpu_custom_call.1} parent=31 // pred_check
          %p183 = pneg %p36
        $region34: #{tpu_custom_call.1} parent=31 // pred_check_branch
          %185 = sbr.rel (%p183) target = $region36
        $region35: #{tpu_custom_call.1} parent=31 // pred_region
          %p186 = scmp.lt.s32.totalorder %s16, 1
          %s187 = scalar_select %p186, %s16, 1
          %s188 = smul.addr %s187, 2
          %s189 = smul.addr %s188, 4
          %s190 = scalar_lea.vmem %s0, %s189
        $region36: #{tpu_custom_call.1} parent=31 // pred_fallthru
          _
      $region32: #{tpu_custom_call.1} parent=5 // pred_fallthru
        _
      %p191 = scmp.le.s32.totalorder 1, %s16
      %p192 = scmp.lt.s32.totalorder %s16, 3
      %p193 = pnand %p191, %p192
      %p194 = pneg %p193
      // Predicated region
      $region37: #{tpu_custom_call.1} parent=5 // pred_check
        _
      $region38: #{tpu_custom_call.1} parent=5 // pred_check_branch
        %196 = sbr.rel (%p193) target = $region40
      $region39: #{tpu_custom_call.1} parent=5 // pred_region
        %s197 = ssub.s32 %s16, 1
        %p198 = scmp.lt.s32.totalorder %s21, 1
        %s199 = scalar_select %p198, %s21, 1
        %s200 = smul.addr %s199, 2
        %s201 = smul.addr %s200, 4
        %s202 = scalar_lea.vmem %s0, %s201
        %p203 = pneg %p42
        %p204 = pneg %p39
        %p205 = pneg %p63
        %p206 = pneg %p60
        %p207 = pneg %p84
        %p208 = pneg %p81
        %p209 = pneg %p105
        %p210 = pneg %p102
        %p211 = pneg %p126
        %p212 = pneg %p123
        %p213 = pneg %p152
        %p214 = pneg %p149
        %s215 = sand.u32 %s139, 1
        %s216 = scalar_lea.sflag [#allocation4], %s215
        %s217 = sand.u32 %s139, 1
        %s218 = smul.addr %s217, 8
        %s219 = scalar_lea.vmem [#allocation3], %s218
        %p220 = scmp.lt.s32.totalorder %s21, 1
        %s221 = scalar_select %p220, %s21, 1
        %s222 = smul.addr %s221, 2
        %s223 = smul.addr %s222, 4
        %s224 = scalar_lea.vmem %s0, %s223
        %v225 = vld [vmem:[%s224] sm:$0xff]
        %v227 = vcombine.high %v225, %v225
        %vm229 = vcmask 1043456
        %v230 = vsel %vm229, %v225, 0.0
        %v231 = vsel %vm229, %v227, 0.0
        %v232 = vadd.f32 %v230, %v231
        %233 = vadd.xlane.f32.xlu0 %v232
        %v234 = vpop.xlane.xlu0 %233
        %v235 = vmul.f32 %v234, 0.00390625
        %v236 = vld [vmem:[%s1] sm:$0xf]
        %v237 = vmul.f32 %v236, %v235
        %vm238 = vcmask 3072
        %v239 = vsel %vm238, %v237, 0.0
        %v240 = vrot.slane %v239, 4
        %v241 = vadd.f32 %v239, %v240
        %v242 = vrot.slane %v241, 2
        %v243 = vadd.f32 %v241, %v242
        %v244 = vrot.slane %v243, 1
        %v245 = vadd.f32 %v243, %v244
        %v246 = vld [vmem:[#allocation2] sm:$0x1]
        %v247 = vadd.f32 %v245, %v246
        %v248 = vmax.f32 %v247, 0.0
        %v249 = vld [vmem:[%s3] sm:$0xf]
        %v250 = vld [vmem:[%s3 + $0x4] sm:$0xf]
        %v251 = vld [vmem:[%s3 + $0x8] sm:$0xf]
        %v252 = vld [vmem:[%s3 + $0xc] sm:$0xf]
        %v253 = vlaneseq
        %v254 = vshrl.u32 %v253, 7
        %v255 = vsub.s32 0, %v254
        %v256 = vrot.slane %v248, %v255
        %v257 = vmul.f32 %v249, %v256
        %v258 = vmul.f32 %v250, %v256
        %v259 = vmul.f32 %v251, %v256
        %v260 = vmul.f32 %v252, %v256
        %v261 = vadd.f32 %v257, 0.0
        %v262 = vadd.f32 %v258, 0.0
        %v263 = vadd.f32 %v259, 0.0
        %v264 = vadd.f32 %v260, 0.0
        %v265 = vld [vmem:[%s4] sm:$0xf]
        %v266 = vld [vmem:[%s4 + $0x4] sm:$0xf]
        %v267 = vld [vmem:[%s4 + $0x8] sm:$0xf]
        %v268 = vld [vmem:[%s4 + $0xc] sm:$0xf]
        %v269 = vadd.f32 %v261, %v265
        %v270 = vadd.f32 %v262, %v266
        %v271 = vadd.f32 %v263, %v267
        %v272 = vadd.f32 %v264, %v268
        %v273 = vadd.f32 %v269, 3.0
        %v274 = vadd.f32 %v270, 3.0
        %v275 = vadd.f32 %v271, 3.0
        %v276 = vadd.f32 %v272, 3.0
        %v277 = vmax.f32 %v273, 0.0
        %v278 = vmax.f32 %v274, 0.0
        %v279 = vmax.f32 %v275, 0.0
        %v280 = vmax.f32 %v276, 0.0
        %v281 = vmin.f32 %v277, 6.0
        %v282 = vmin.f32 %v278, 6.0
        %v283 = vmin.f32 %v279, 6.0
        %v284 = vmin.f32 %v280, 6.0
        %v285 = vmul.f32 %v281, 0.16666667
        %v286 = vmul.f32 %v282, 0.16666667
        %v287 = vmul.f32 %v283, 0.16666667
        %v288 = vmul.f32 %v284, 0.16666667
        %v289 = vsub.f32 %v285, 0.5
        %v290 = vsub.f32 %v286, 0.5
        %v291 = vsub.f32 %v287, 0.5
        %v292 = vsub.f32 %v288, 0.5
        %v293 = vmul.f32 %v289, 2.0
        %v294 = vadd.f32 %v293, 1.0
        %v295 = vmul.f32 %v291, 2.0
        %297 = vset.pattern.permute.xlu0 0
        %298 = vperm.xlu0 %297, %v294
        %v299 = vpop.permute.xlu0 %298
        %v301 = vunpack.c.l.s4 839922192
        %v302 = vunpack.c.0.s8 %v301
        %v303 = vlaneseq
        %v304 = vshrl.u32 %v303, 7
        %v305 = vsub.s32 %v302, %v304
        %v306 = vrot.slane %v299, %v305
        %v308 = vmul.f32 %v225, %v306
        %310 = vset.pattern.permute.xlu0 0
        %311 = vperm.xlu0 %310, %v290
        %v312 = vpop.permute.xlu0 %311
        %v314 = vunpack.c.l.s4 839922192
        %v315 = vunpack.c.0.s8 %v314
        %v316 = vlaneseq
        %v317 = vshrl.u32 %v316, 7
        %v318 = vsub.s32 %v315, %v317
        %v319 = vrot.slane %v312, %v318
        %v321 = vadd.f32 %v308, %v319
        %323 = vset.pattern.permute.xlu0 0
        %324 = vperm.xlu0 %323, %v295
        %v325 = vpop.permute.xlu0 %324
        %v327 = vunpack.c.l.s4 839922192
        %v328 = vunpack.c.0.s8 %v327
        %v329 = vlaneseq
        %v330 = vshrl.u32 %v329, 7
        %v331 = vsub.s32 %v328, %v330
        %v332 = vrot.slane %v325, %v331
        %v334 = vmul.f32 %v225, %v332
        %336 = vset.pattern.permute.xlu0 0
        %337 = vperm.xlu0 %336, %v292
        %v338 = vpop.permute.xlu0 %337
        %v340 = vunpack.c.l.s4 839922192
        %v341 = vunpack.c.0.s8 %v340
        %v342 = vlaneseq
        %v343 = vshrl.u32 %v342, 7
        %v344 = vsub.s32 %v341, %v343
        %v345 = vrot.slane %v338, %v344
        %v347 = vadd.f32 %v334, %v345
        %v348 = vmax.f32 %v321, %v347
        %349 = vst [vmem:[%s219] sm:$0xff] %v348
        %s350 = sand.u32 %s139, 1
        %s351 = scalar_lea.sflag [#allocation4], %s350
        %s352 = sand.u32 %s139, 1
        %s353 = smul.addr %s352, 8
        %s354 = scalar_lea.vmem [#allocation3], %s353
        // Predicated region
        $region41: #{tpu_custom_call.1} parent=39 // pred_check
          %p355 = pneg %p149
        $region42: #{tpu_custom_call.1} parent=39 // pred_check_branch
          %357 = sbr.rel (%p355) target = $region44
        $region43: #{tpu_custom_call.1} parent=39 // pred_region
          %s359 = ssub.s32 128, 128
          %360 = vsyncadd %s351, %s359
          %s361 = smul.addr %s21, 2
          %s362 = smul.addr %s361, 64
          %s363 = scalar_lea.hbm %s5, %s362
          %s365 = sshll.u32 %s354, 4
          %s366 = int_to_ptr.vmem [resolvable:$true] %s365
          %368 = dma.vmem_to_hbm [thread:$0]  %s366, 128, %s363, %s351
        $region44: #{tpu_custom_call.1} parent=39 // pred_fallthru
          _
      $region40: #{tpu_custom_call.1} parent=5 // pred_fallthru
        _
      %p369 = scmp.le.s32.totalorder 2, %s16
      // Predicated region
      $region45: #{tpu_custom_call.1} parent=5 // pred_check
        %p370 = pneg %p369
      $region46: #{tpu_custom_call.1} parent=5 // pred_check_branch
        %372 = sbr.rel (%p370) target = $region48
      $region47: #{tpu_custom_call.1} parent=5 // pred_region
        %s373 = ssub.s32 %s16, 2
        // Predicated region
        $region49: #{tpu_custom_call.1} parent=47 // pred_check
          %p374 = pneg %p155
        $region50: #{tpu_custom_call.1} parent=47 // pred_check_branch
          %376 = sbr.rel (%p374) target = $region52
        $region51: #{tpu_custom_call.1} parent=47 // pred_region
          %s377 = sand.u32 %s140, 1
          %s378 = scalar_lea.sflag [#allocation4], %s377
          %s379 = sand.u32 %s140, 1
          %s380 = smul.addr %s379, 8
          %s381 = scalar_lea.vmem [#allocation3], %s380
          %382 = dma.done %s378, 128
        $region52: #{tpu_custom_call.1} parent=47 // pred_fallthru
          _
      $region48: #{tpu_custom_call.1} parent=5 // pred_fallthru
        _
    $region6: #{tpu_custom_call.1} parent=1 // loop_footer
      %s20 = sadd.s32 1, %s16
    $region7: #{tpu_custom_call.1} parent=1 // loop_footer_branch
      %15 = sbr.rel target = $region3
    $region8: #{tpu_custom_call.1} parent=1 // loop_exit
      _
    %383 = vsyncpa [#allocation4], 1
    %s384 = scalar_lea.sflag [#allocation4], 1
    %385 = vsyncpa %s384, 1

</llo_original>
